<compile_context>
chip_gen: v7x
topology: tpu7x:2x2x1
jax: 0.10.0
libtpu: 0.0.40
codegen_flags: <defaults>
</compile_context>

<pallas_src>
import functools

import jax
import jax.numpy as jnp
import numpy as np
from jax.experimental import pallas as pl
from jax.experimental.pallas import tpu as pltpu


# ----------------------------- elementwise math ------------------------------

def _silu(x):
    # x * sigmoid(x); jax.nn.sigmoid lowers to a single EUP logistic op.
    return x * jax.nn.sigmoid(x)


def _softplus(x):
    # matches torch.nn.Softplus(beta=1, threshold=20); always evaluated in f32
    # (only H values per row, negligible).
    x = x.astype(jnp.float32)
    return jnp.where(x > 20.0, x, jnp.log1p(jnp.exp(jnp.minimum(x, 20.0))))


# --------------------------------- kernel ------------------------------------

def _mtl_kernel(x_ref, w0_ref, b0_ref, w1_ref, b1_ref,
                wh1_ref, bh1_ref, w2_ref, b2_ref,
                em_ref, tot_ref, *, num_tasks, act_dtype):
    # Cast to bf16 in-kernel (x arrives as f32 straight from HBM).
    x = x_ref[...].astype(jnp.bfloat16)                                # [TB, D]

    # shared trunk (BatchNorm already folded into w1/b1)
    h1 = jnp.dot(x, w0_ref[...],
                 preferred_element_type=jnp.float32) + b0_ref[...]     # [TB, 256] f32
    h1 = _silu(h1.astype(act_dtype))
    # TODO(synk): Dropout(0.3) is identity in eval mode; not emitted.
    h2 = jnp.dot(h1.astype(jnp.bfloat16), w1_ref[...],
                 preferred_element_type=jnp.float32) + b1_ref[...]     # [TB, 128] f32
    h2 = _silu(h2.astype(act_dtype))

    # all heads' first Linear(128,64) fused into one [128, HW_pad] matmul
    # (HW_pad = H*64 rounded up to a multiple of 128; pad block is zero).
    a = jnp.dot(h2.astype(jnp.bfloat16), wh1_ref[...],
                preferred_element_type=jnp.float32) + bh1_ref[...]     # [TB, HW_pad] f32
    a = _silu(a.astype(act_dtype))
    # TODO(synk): Dropout(0.2) is identity in eval mode; not emitted.

    # all heads' second Linear(64,1) as a block-diagonal [HW_pad, H] matmul.
    o = jnp.dot(a.astype(jnp.bfloat16), w2_ref[...],
                preferred_element_type=jnp.float32) + b2_ref[...]      # [TB, H] f32
    o = _softplus(o)

    # Two outputs -> no wrapper-side slicing launches. Output traffic is tiny,
    # so the narrow (<128 lane) stores are accepted.
    em_ref[...] = o[:, :num_tasks]
    tot_ref[...] = o[:, num_tasks:num_tasks + 1]


# ------------------------------ host wrapper ---------------------------------

def multitask_forward(x, params, num_tasks, tile_b=None,
                      act_dtype=jnp.float32):
    """Fused forward. Returns (emissions [B, num_tasks], total [B, 1]).

    tile_b=None -> single grid step (best on single-TC v5e/v6e).
    On v7x pass tile_b=B//2 so both TensorCores get a grid step.
    """
    B, D = x.shape
    H = num_tasks + 1
    D0 = params["w0"].shape[1]          # hidden_dims[0]
    D1 = params["w1"].shape[1]          # hidden_dims[1]
    HW = params["wh1"].shape[1]         # padded fused head width (mult. of 128)

    if tile_b is None:
        tile_b = B
    tile_b = min(tile_b, B)
    assert B % tile_b == 0, "batch must be divisible by tile_b"
    grid = (B // tile_b,)

    def fixed(shape):
        # weights/biases: same block every grid step, stays resident in VMEM.
        return pl.BlockSpec(shape, lambda i: (0, 0))

    # advisory cost estimate for XLA's scheduler
    flops = 2 * B * (D * D0 + D0 * D1 + D1 * HW + HW * H)
    transcendentals = B * (D0 + D1 + HW + 2 * H)
    param_bytes = sum(int(p.size) * p.dtype.itemsize for p in params.values())
    bytes_accessed = (int(x.size) * x.dtype.itemsize + param_bytes
                      + B * num_tasks * 4 + B * 4)

    kernel = functools.partial(_mtl_kernel, num_tasks=num_tasks,
                               act_dtype=act_dtype)

    emissions, total = pl.pallas_call(
        kernel,
        out_shape=(jax.ShapeDtypeStruct((B, num_tasks), jnp.float32),
                   jax.ShapeDtypeStruct((B, 1), jnp.float32)),
        grid_spec=pltpu.PrefetchScalarGridSpec(
            num_scalar_prefetch=0,
            grid=grid,
            in_specs=[
                pl.BlockSpec((tile_b, D), lambda i: (i, 0)),   # x (batch-tiled, f32)
                fixed((D, D0)),        # w0        (bf16)
                fixed((1, D0)),        # b0        (f32)
                fixed((D0, D1)),       # w1 (BN folded, bf16)
                fixed((1, D1)),        # b1 (BN folded, f32)
                fixed((D1, HW)),       # fused head first-layer weights (bf16)
                fixed((1, HW)),        # fused head first-layer biases  (f32)
                fixed((HW, H)),        # block-diag head second-layer weights (bf16)
                fixed((1, H)),         # head second-layer biases (f32)
            ],
            out_specs=(pl.BlockSpec((tile_b, num_tasks), lambda i: (i, 0)),
                       pl.BlockSpec((tile_b, 1), lambda i: (i, 0))),
        ),
        compiler_params=pltpu.CompilerParams(
            dimension_semantics=("parallel",)),
        cost_estimate=pl.CostEstimate(
            flops=flops,
            transcendentals=transcendentals,
            bytes_accessed=bytes_accessed),
    )(x, params["w0"], params["b0"], params["w1"], params["b1"],
      params["wh1"], params["bh1"], params["w2bd"], params["b2"])

    return emissions, total


# --------------------------- parameter construction --------------------------

def make_params(key, input_size, num_tasks, hidden_dims=(256, 128)):
    """Deterministic synthetic parameters, pre-arranged for the fused kernel."""
    d0, d1 = hidden_dims
    H = num_tasks + 1
    HW = H * 64
    HW_pad = ((HW + 127) // 128) * 128      # lane-dense fused head width

    ks = jax.random.split(key, 8 + 4 * H)
    ki = iter(range(len(ks)))

    def rnd(shape, scale):
        return (scale * jax.random.normal(ks[next(ki)], shape)).astype(jnp.float32)

    # shared trunk
    w0 = rnd((input_size, d0), 1.0 / np.sqrt(input_size))
    b0 = rnd((1, d0), 0.01)
    w1 = rnd((d0, d1), 1.0 / np.sqrt(d0))
    b1 = rnd((1, d1), 0.01)

    # BatchNorm1d eval-mode params / running stats
    gamma = 1.0 + rnd((1, d1), 0.05)
    beta = rnd((1, d1), 0.05)
    run_mean = rnd((1, d1), 0.05)
    run_var = jnp.abs(1.0 + rnd((1, d1), 0.05))
    eps = 1e-5
    bn_scale = gamma / jnp.sqrt(run_var + eps)
    bn_shift = beta - run_mean * bn_scale

    # fold BN into the second trunk Linear: ((x@w1 + b1)*s + t) = x@(w1*s) + (b1*s + t)
    w1f = w1 * bn_scale
    b1f = b1 * bn_scale + bn_shift

    # heads: num_tasks emission heads + 1 total head, each Linear(d1,64)+Linear(64,1)
    wh1_list, bh1_list, w2_list, b2_list = [], [], [], []
    for _ in range(H):
        wh1_list.append(rnd((d1, 64), 1.0 / np.sqrt(d1)))
        bh1_list.append(rnd((1, 64), 0.01))
        w2_list.append(rnd((64, 1), 1.0 / np.sqrt(64)))
        b2_list.append(rnd((1, 1), 0.01))

    # fused + lane-padded first-layer head weights/biases
    wh1 = np.zeros((d1, HW_pad), dtype=np.float32)
    bh1 = np.zeros((1, HW_pad), dtype=np.float32)
    wh1[:, :HW] = np.asarray(jnp.concatenate(wh1_list, axis=1))
    bh1[:, :HW] = np.asarray(jnp.concatenate(bh1_list, axis=1))

    # block-diagonal packing of the per-head [64, 1] second-layer weights
    # (padding rows stay zero -> dummy head block is inert)
    w2bd = np.zeros((HW_pad, H), dtype=np.float32)
    for h in range(H):
        w2bd[h * 64:(h + 1) * 64, h] = np.asarray(w2_list[h])[:, 0]
    b2 = jnp.concatenate(b2_list, axis=1)                    # [1, H]

    bf16 = jnp.bfloat16
    return dict(
        w0=w0.astype(bf16), b0=b0,
        w1=w1f.astype(bf16), b1=b1f,
        wh1=jnp.asarray(wh1).astype(bf16), bh1=jnp.asarray(bh1),
        w2bd=jnp.asarray(w2bd).astype(bf16), b2=b2)


# ------------------------------ pure-JAX references --------------------------

def reference_forward_matched(x, p, num_tasks, act_dtype=jnp.float32):
    """Mirrors the kernel's dtype pipeline exactly (bf16 matmul inputs, f32 accum,
    act_dtype elementwise)."""
    xb = x.astype(jnp.bfloat16)
    h1 = jnp.dot(xb, p["w0"], preferred_element_type=jnp.float32) + p["b0"]
    h1 = _silu(h1.astype(act_dtype))
    h2 = jnp.dot(h1.astype(jnp.bfloat16), p["w1"],
                 preferred_element_type=jnp.float32) + p["b1"]
    h2 = _silu(h2.astype(act_dtype))
    a = jnp.dot(h2.astype(jnp.bfloat16), p["wh1"],
                preferred_element_type=jnp.float32) + p["bh1"]
    a = _silu(a.astype(act_dtype))
    o = jnp.dot(a.astype(jnp.bfloat16), p["w2bd"],
                preferred_element_type=jnp.float32) + p["b2"]
    sp = _softplus(o)
    return sp[:, :num_tasks], sp[:, num_tasks:num_tasks + 1]


def reference_forward_f32(x, p, num_tasks):
    """Full-precision semantic reference (weights upcast to f32)."""
    f32 = jnp.float32
    h1 = jax.nn.silu(x @ p["w0"].astype(f32) + p["b0"])
    h2 = jax.nn.silu(h1 @ p["w1"].astype(f32) + p["b1"])
    a = jax.nn.silu(h2 @ p["wh1"].astype(f32) + p["bh1"])
    o = a @ p["w2bd"].astype(f32) + p["b2"]
    sp = jnp.where(o > 20.0, o, jnp.log1p(jnp.exp(jnp.minimum(o, 20.0))))
    return sp[:, :num_tasks], sp[:, num_tasks:num_tasks + 1]


# ----------------------------------- main -------------------------------------

if __name__ == "__main__":
    INPUT_SIZE = 64
    NUM_TASKS = 4
    HIDDEN_DIMS = (256, 128)
    BATCH = 32               # small demo shape; single grid step (tile_b = B)

    # bf16 elementwise (SiLU) only where the VPU/EUP have a bf16 path.
    dk = jax.devices()[0].device_kind.lower()
    use_bf16_act = not any(t in dk for t in ("v2", "v3", "v4", "v5"))
    act_dtype = jnp.bfloat16 if use_bf16_act else jnp.float32

    key = jax.random.PRNGKey(0)
    kx, kp = jax.random.split(key)
    x = jax.random.normal(kx, (BATCH, INPUT_SIZE), dtype=jnp.float32)
    params = make_params(kp, INPUT_SIZE, NUM_TASKS, HIDDEN_DIMS)

    emissions, total = multitask_forward(x, params, NUM_TASKS,
                                         tile_b=None, act_dtype=act_dtype)
    emissions = jax.block_until_ready(emissions)
    total = jax.block_until_ready(total)

    assert emissions.shape == (BATCH, NUM_TASKS)
    assert total.shape == (BATCH, 1)

    # check against a dtype-matched reference (kernel correctness). The bf16-act
    # path gets a looser tolerance: MXU vs XLA accumulation-order deltas can flip
    # a bf16 rounding.
    ref_em, ref_tot = reference_forward_matched(x, params, NUM_TASKS,
                                                act_dtype=act_dtype)
    tol = 2e-2 if use_bf16_act else 1e-3
    np.testing.assert_allclose(np.asarray(emissions), np.asarray(ref_em),
                               rtol=tol, atol=tol)
    np.testing.assert_allclose(np.asarray(total), np.asarray(ref_tot),
                               rtol=tol, atol=tol)

    # loose check against full-precision semantics (bf16 quantization sanity)
    f32_em, f32_tot = reference_forward_f32(x, params, NUM_TASKS)
    np.testing.assert_allclose(np.asarray(emissions), np.asarray(f32_em),
                               rtol=0.1, atol=0.1)
    np.testing.assert_allclose(np.asarray(total), np.asarray(f32_tot),
                               rtol=0.1, atol=0.1)

    print("KERNEL_OK")
</pallas_src>

<mosaic_0001>
module attributes {stable_mosaic.version = 11 : i64} {
  func.func @_mtl_kernel(%arg0: i32, %arg1: memref<32x64xf32, #tpu.memory_space<vmem>>, %arg2: memref<64x256xbf16, #tpu.memory_space<vmem>>, %arg3: memref<1x256xf32, #tpu.memory_space<vmem>>, %arg4: memref<256x128xbf16, #tpu.memory_space<vmem>>, %arg5: memref<1x128xf32, #tpu.memory_space<vmem>>, %arg6: memref<128x384xbf16, #tpu.memory_space<vmem>>, %arg7: memref<1x384xf32, #tpu.memory_space<vmem>>, %arg8: memref<384x5xbf16, #tpu.memory_space<vmem>>, %arg9: memref<1x5xf32, #tpu.memory_space<vmem>>, %arg10: memref<32x4xf32, #tpu.memory_space<vmem>>, %arg11: memref<32x1xf32, #tpu.memory_space<vmem>>) attributes {dimension_semantics = [#tpu.dimension_semantics<parallel>], iteration_bounds = array<i64: 1>, scalar_prefetch = 0 : i64, scratch_operands = 0 : i64, tpu.core_type = #tpu.core_type<tc>, window_params = [{transform_indices = @transform_0, window_bounds = array<i64: 32, 64>}, {pipeline_mode = #tpu.pipeline_mode<synchronous>, transform_indices = @transform_1, window_bounds = array<i64: 64, 256>}, {pipeline_mode = #tpu.pipeline_mode<synchronous>, transform_indices = @transform_2, window_bounds = array<i64: 1, 256>}, {pipeline_mode = #tpu.pipeline_mode<synchronous>, transform_indices = @transform_3, window_bounds = array<i64: 256, 128>}, {pipeline_mode = #tpu.pipeline_mode<synchronous>, transform_indices = @transform_4, window_bounds = array<i64: 1, 128>}, {pipeline_mode = #tpu.pipeline_mode<synchronous>, transform_indices = @transform_5, window_bounds = array<i64: 128, 384>}, {pipeline_mode = #tpu.pipeline_mode<synchronous>, transform_indices = @transform_6, window_bounds = array<i64: 1, 384>}, {pipeline_mode = #tpu.pipeline_mode<synchronous>, transform_indices = @transform_7, window_bounds = array<i64: 384, 5>}, {pipeline_mode = #tpu.pipeline_mode<synchronous>, transform_indices = @transform_8, window_bounds = array<i64: 1, 5>}, {transform_indices = @transform_9, window_bounds = array<i64: 32, 4>}, {transform_indices = @transform_10, window_bounds = array<i64: 32, 1>}]} {
    %c0 = arith.constant 0 : index
    %c0_0 = arith.constant 0 : index
    %0 = vector.load %arg1[%c0, %c0_0] : memref<32x64xf32, #tpu.memory_space<vmem>>, vector<32x64xf32>
    %1 = arith.truncf %0 : vector<32x64xf32> to vector<32x64xbf16>
    %c0_1 = arith.constant 0 : index
    %c0_2 = arith.constant 0 : index
    %2 = vector.load %arg2[%c0_1, %c0_2] : memref<64x256xbf16, #tpu.memory_space<vmem>>, vector<64x256xbf16>
    %cst = arith.constant dense<0.000000e+00> : vector<32x256xf32>
    %3 = tpu.matmul %1, %2, %cst {dimension_numbers = #tpu.dot_dimension_numbers<[1], [0], [0], [1], [0, 0, 1, 1], [], []>} : vector<32x64xbf16>, vector<64x256xbf16>, vector<32x256xf32> -> vector<32x256xf32>
    %c0_3 = arith.constant 0 : index
    %c0_4 = arith.constant 0 : index
    %4 = vector.load %arg3[%c0_3, %c0_4] : memref<1x256xf32, #tpu.memory_space<vmem>>, vector<1x256xf32>
    %5 = vector.broadcast %4 : vector<1x256xf32> to vector<32x256xf32>
    %6 = arith.addf %3, %5 : vector<32x256xf32>
    %7 = arith.truncf %6 : vector<32x256xf32> to vector<32x256xbf16>
    %8 = arith.negf %7 : vector<32x256xbf16>
    %9 = math.exp %8 : vector<32x256xbf16>
    %cst_5 = arith.constant 1.000000e+00 : bf16
    %10 = vector.broadcast %cst_5 : bf16 to vector<32x256xbf16>
    %11 = arith.addf %10, %9 : vector<32x256xbf16>
    %12 = arith.divf %10, %11 : vector<32x256xbf16>
    %13 = arith.mulf %7, %12 : vector<32x256xbf16>
    %c0_6 = arith.constant 0 : index
    %c0_7 = arith.constant 0 : index
    %14 = vector.load %arg4[%c0_6, %c0_7] : memref<256x128xbf16, #tpu.memory_space<vmem>>, vector<256x128xbf16>
    %cst_8 = arith.constant dense<0.000000e+00> : vector<32x128xf32>
    %15 = tpu.matmul %13, %14, %cst_8 {dimension_numbers = #tpu.dot_dimension_numbers<[1], [0], [0], [1], [0, 0, 1, 1], [], []>} : vector<32x256xbf16>, vector<256x128xbf16>, vector<32x128xf32> -> vector<32x128xf32>
    %c0_9 = arith.constant 0 : index
    %c0_10 = arith.constant 0 : index
    %16 = vector.load %arg5[%c0_9, %c0_10] : memref<1x128xf32, #tpu.memory_space<vmem>>, vector<1x128xf32>
    %17 = vector.broadcast %16 : vector<1x128xf32> to vector<32x128xf32>
    %18 = arith.addf %15, %17 : vector<32x128xf32>
    %19 = arith.truncf %18 : vector<32x128xf32> to vector<32x128xbf16>
    %20 = arith.negf %19 : vector<32x128xbf16>
    %21 = math.exp %20 : vector<32x128xbf16>
    %cst_11 = arith.constant 1.000000e+00 : bf16
    %22 = vector.broadcast %cst_11 : bf16 to vector<32x128xbf16>
    %23 = arith.addf %22, %21 : vector<32x128xbf16>
    %24 = arith.divf %22, %23 : vector<32x128xbf16>
    %25 = arith.mulf %19, %24 : vector<32x128xbf16>
    %c0_12 = arith.constant 0 : index
    %c0_13 = arith.constant 0 : index
    %26 = vector.load %arg6[%c0_12, %c0_13] : memref<128x384xbf16, #tpu.memory_space<vmem>>, vector<128x384xbf16>
    %cst_14 = arith.constant dense<0.000000e+00> : vector<32x384xf32>
    %27 = tpu.matmul %25, %26, %cst_14 {dimension_numbers = #tpu.dot_dimension_numbers<[1], [0], [0], [1], [0, 0, 1, 1], [], []>} : vector<32x128xbf16>, vector<128x384xbf16>, vector<32x384xf32> -> vector<32x384xf32>
    %c0_15 = arith.constant 0 : index
    %c0_16 = arith.constant 0 : index
    %28 = vector.load %arg7[%c0_15, %c0_16] : memref<1x384xf32, #tpu.memory_space<vmem>>, vector<1x384xf32>
    %29 = vector.broadcast %28 : vector<1x384xf32> to vector<32x384xf32>
    %30 = arith.addf %27, %29 : vector<32x384xf32>
    %31 = arith.truncf %30 : vector<32x384xf32> to vector<32x384xbf16>
    %32 = arith.negf %31 : vector<32x384xbf16>
    %33 = math.exp %32 : vector<32x384xbf16>
    %cst_17 = arith.constant 1.000000e+00 : bf16
    %34 = vector.broadcast %cst_17 : bf16 to vector<32x384xbf16>
    %35 = arith.addf %34, %33 : vector<32x384xbf16>
    %36 = arith.divf %34, %35 : vector<32x384xbf16>
    %37 = arith.mulf %31, %36 : vector<32x384xbf16>
    %c0_18 = arith.constant 0 : index
    %c0_19 = arith.constant 0 : index
    %38 = vector.load %arg8[%c0_18, %c0_19] : memref<384x5xbf16, #tpu.memory_space<vmem>>, vector<384x5xbf16>
    %cst_20 = arith.constant dense<0.000000e+00> : vector<32x5xf32>
    %39 = tpu.matmul %37, %38, %cst_20 {dimension_numbers = #tpu.dot_dimension_numbers<[1], [0], [0], [1], [0, 0, 1, 1], [], []>} : vector<32x384xbf16>, vector<384x5xbf16>, vector<32x5xf32> -> vector<32x5xf32>
    %c0_21 = arith.constant 0 : index
    %c0_22 = arith.constant 0 : index
    %40 = vector.load %arg9[%c0_21, %c0_22] : memref<1x5xf32, #tpu.memory_space<vmem>>, vector<1x5xf32>
    %41 = vector.broadcast %40 : vector<1x5xf32> to vector<32x5xf32>
    %42 = arith.addf %39, %41 : vector<32x5xf32>
    %cst_23 = arith.constant 2.000000e+01 : f32
    %43 = vector.broadcast %cst_23 : f32 to vector<32x5xf32>
    %44 = arith.cmpf ogt, %42, %43 : vector<32x5xf32>
    %cst_24 = arith.constant 2.000000e+01 : f32
    %45 = vector.broadcast %cst_24 : f32 to vector<32x5xf32>
    %46 = arith.minimumf %42, %45 : vector<32x5xf32>
    %47 = math.exp %46 : vector<32x5xf32>
    %48 = math.log1p %47 : vector<32x5xf32>
    %49 = arith.select %44, %42, %48 : vector<32x5xi1>, vector<32x5xf32>
    %50 = vector.extract_strided_slice %49 {offsets = [0, 0], sizes = [32, 4], strides = [1, 1]} : vector<32x5xf32> to vector<32x4xf32>
    %c0_25 = arith.constant 0 : index
    %c0_26 = arith.constant 0 : index
    %51 = vector.load %arg10[%c0_25, %c0_26] : memref<32x4xf32, #tpu.memory_space<vmem>>, vector<32x4xf32>
    tpu.vector_store %arg10[%c0_25, %c0_26], %50 {strides = array<i32>} : memref<32x4xf32, #tpu.memory_space<vmem>>, vector<32x4xf32>,
    %52 = vector.extract_strided_slice %49 {offsets = [0, 4], sizes = [32, 1], strides = [1, 1]} : vector<32x5xf32> to vector<32x1xf32>
    %c0_27 = arith.constant 0 : index
    %c0_28 = arith.constant 0 : index
    %53 = vector.load %arg11[%c0_27, %c0_28] : memref<32x1xf32, #tpu.memory_space<vmem>>, vector<32x1xf32>
    tpu.vector_store %arg11[%c0_27, %c0_28], %52 {strides = array<i32>} : memref<32x1xf32, #tpu.memory_space<vmem>>, vector<32x1xf32>,
    return
  }
  func.func @transform_0(%arg0: i32) -> (i32, i32) {
    %c0_i32 = arith.constant 0 : i32
    %c0_i32_0 = arith.constant 0 : i32
    return %arg0, %c0_i32 : i32, i32
  }
  func.func @transform_1(%arg0: i32) -> (i32, i32) {
    %c0_i32 = arith.constant 0 : i32
    %c0_i32_0 = arith.constant 0 : i32
    %c0_i32_1 = arith.constant 0 : i32
    return %c0_i32, %c0_i32_0 : i32, i32
  }
  func.func @transform_2(%arg0: i32) -> (i32, i32) {
    %c0_i32 = arith.constant 0 : i32
    %c0_i32_0 = arith.constant 0 : i32
    %c0_i32_1 = arith.constant 0 : i32
    return %c0_i32, %c0_i32_0 : i32, i32
  }
  func.func @transform_3(%arg0: i32) -> (i32, i32) {
    %c0_i32 = arith.constant 0 : i32
    %c0_i32_0 = arith.constant 0 : i32
    %c0_i32_1 = arith.constant 0 : i32
    return %c0_i32, %c0_i32_0 : i32, i32
  }
  func.func @transform_4(%arg0: i32) -> (i32, i32) {
    %c0_i32 = arith.constant 0 : i32
    %c0_i32_0 = arith.constant 0 : i32
    %c0_i32_1 = arith.constant 0 : i32
    return %c0_i32, %c0_i32_0 : i32, i32
  }
  func.func @transform_5(%arg0: i32) -> (i32, i32) {
    %c0_i32 = arith.constant 0 : i32
    %c0_i32_0 = arith.constant 0 : i32
    %c0_i32_1 = arith.constant 0 : i32
    return %c0_i32, %c0_i32_0 : i32, i32
  }
  func.func @transform_6(%arg0: i32) -> (i32, i32) {
    %c0_i32 = arith.constant 0 : i32
    %c0_i32_0 = arith.constant 0 : i32
    %c0_i32_1 = arith.constant 0 : i32
    return %c0_i32, %c0_i32_0 : i32, i32
  }
  func.func @transform_7(%arg0: i32) -> (i32, i32) {
    %c0_i32 = arith.constant 0 : i32
    %c0_i32_0 = arith.constant 0 : i32
    %c0_i32_1 = arith.constant 0 : i32
    return %c0_i32, %c0_i32_0 : i32, i32
  }
  func.func @transform_8(%arg0: i32) -> (i32, i32) {
    %c0_i32 = arith.constant 0 : i32
    %c0_i32_0 = arith.constant 0 : i32
    %c0_i32_1 = arith.constant 0 : i32
    return %c0_i32, %c0_i32_0 : i32, i32
  }
  func.func @transform_9(%arg0: i32) -> (i32, i32) {
    %c0_i32 = arith.constant 0 : i32
    %c0_i32_0 = arith.constant 0 : i32
    return %arg0, %c0_i32 : i32, i32
  }
  func.func @transform_10(%arg0: i32) -> (i32, i32) {
    %c0_i32 = arith.constant 0 : i32
    %c0_i32_0 = arith.constant 0 : i32
    return %arg0, %c0_i32 : i32, i32
  }
}

</mosaic_0001>

<llo_original>
// kernel: tpu_custom_call.1
$region0: #{tpu_custom_call.1}
  #allocation0 [shape = 'u32[]', space=smem, size = 0x4, offset = 0x4, fixed_abs, tag = 'smem constant byte address 0x4 - core index']
  #allocation1 [shape = 'u32[144,128]{1,0:T(1,128)}', space=vmem, size = 0x12000, scoped, tag = 'internal scratch']
  %s0 = inlined_call_operand.hbm [shape: f32[32,64], index: 0, kind: input, shape index: {}]
  %s1 = inlined_call_operand.hbm [shape: bf16[64,256], index: 1, kind: input, shape index: {}]
  %s2 = inlined_call_operand.vmem [shape: f32[1,256], index: 2, kind: input, shape index: {}]
  %s3 = inlined_call_operand.hbm [shape: bf16[256,128], index: 3, kind: input, shape index: {}]
  %s4 = inlined_call_operand.vmem [shape: f32[1,128], index: 4, kind: input, shape index: {}]
  %s5 = inlined_call_operand.vmem [shape: bf16[128,384], index: 5, kind: input, shape index: {}]
  %s6 = inlined_call_operand.vmem [shape: f32[1,384], index: 6, kind: input, shape index: {}]
  %s7 = inlined_call_operand.vmem [shape: bf16[384,5], index: 7, kind: input, shape index: {}]
  %s8 = inlined_call_operand.vmem [shape: f32[1,5], index: 8, kind: input, shape index: {}]
  %s9 = inlined_call_operand.vmem [shape: f32[32,4], index: 9, kind: output, shape index: {0}]
  %s10 = inlined_call_operand.vmem [shape: f32[32,1], index: 10, kind: output, shape index: {1}]
  %11 = xla_tuple %s9, %s10
  %s12 = sld [smem:[#allocation0]]
  $region66: #{tpu_custom_call.1} parent=0
    _
  %s14 = ssub.s32 1, %s12
  %s15 = scalar_select 0, %s14, %s12
  $region1: #{tpu_custom_call.1} parent=0
    #allocation2 [shape = 'u8[16384]{0}', space=vmem, size = 0x4000, scoped, tag = 'input window, operand 0, single buffered']
    #allocation3 [shape = 's32[1]{0}', space=sflag, size = 0x4, scoped, tag = 'scoped memory for tpu_custom_call.1']
    #allocation4 [shape = 'u8[32768]{0}', space=vmem, size = 0x8000, scoped, tag = 'input window, operand 1, single buffered']
    #allocation5 [shape = 's32[1]{0}', space=sflag, size = 0x4, scoped, tag = 'scoped memory for tpu_custom_call.1']
    #allocation6 [shape = 'u8[65536]{0}', space=vmem, size = 0x10000, scoped, tag = 'input window, operand 3, single buffered']
    %16 = vsyncpa [#allocation3], 0
    %17 = vsyncpa [#allocation5], 0
    // Predicated region
    $region2: #{tpu_custom_call.1} parent=1 // pred_check
      _
    $region3: #{tpu_custom_call.1} parent=1 // pred_check_branch
      %19 = sbr.rel (0) target = $region5
    $region4: #{tpu_custom_call.1} parent=1 // pred_region
      %s21 = ssub.s32 512, 512
      %22 = vsyncadd [#allocation3], %s21
      %s23 = sshll.u32 [#allocation2], 4
      %s24 = int_to_ptr.vmem [resolvable:$true] %s23
      %29 = dma.hbm_to_vmem [thread:$0]  %s0, 512, %s24, [#allocation3], 128, 128, 8
    $region5: #{tpu_custom_call.1} parent=1 // pred_fallthru
      _
    // Predicated region
    $region6: #{tpu_custom_call.1} parent=1 // pred_check
      _
    $region7: #{tpu_custom_call.1} parent=1 // pred_check_branch
      %31 = sbr.rel (0) target = $region9
    $region8: #{tpu_custom_call.1} parent=1 // pred_region
      %s33 = ssub.s32 1024, 1024
      %34 = vsyncadd [#allocation5], %s33
      %s35 = sshll.u32 [#allocation4], 4
      %s36 = int_to_ptr.vmem [resolvable:$true] %s35
      %41 = dma.hbm_to_vmem [thread:$0]  %s1, 1024, %s36, [#allocation5], 128, 128, 8
    $region9: #{tpu_custom_call.1} parent=1 // pred_fallthru
      _
    // Predicated region
    $region10: #{tpu_custom_call.1} parent=1 // pred_check
      _
    $region11: #{tpu_custom_call.1} parent=1 // pred_check_branch
      %43 = sbr.rel (0) target = $region13
    $region12: #{tpu_custom_call.1} parent=1 // pred_region
      _
    $region13: #{tpu_custom_call.1} parent=1 // pred_fallthru
      _
    // Predicated region
    $region14: #{tpu_custom_call.1} parent=1 // pred_check
      _
    $region15: #{tpu_custom_call.1} parent=1 // pred_check_branch
      %45 = sbr.rel (0) target = $region17
    $region16: #{tpu_custom_call.1} parent=1 // pred_region
      %s47 = ssub.s32 2048, 2048
      %48 = vsyncadd [#allocation5], %s47
      %s49 = sshll.u32 [#allocation6], 4
      %s50 = int_to_ptr.vmem [resolvable:$true] %s49
      %55 = dma.hbm_to_vmem [thread:$0]  %s3, 2048, %s50, [#allocation5], 64, 64, 4
    $region17: #{tpu_custom_call.1} parent=1 // pred_fallthru
      _
    // Predicated region
    $region18: #{tpu_custom_call.1} parent=1 // pred_check
      _
    $region19: #{tpu_custom_call.1} parent=1 // pred_check_branch
      %57 = sbr.rel (0) target = $region21
    $region20: #{tpu_custom_call.1} parent=1 // pred_region
      _
    $region21: #{tpu_custom_call.1} parent=1 // pred_fallthru
      _
    // Predicated region
    $region22: #{tpu_custom_call.1} parent=1 // pred_check
      _
    $region23: #{tpu_custom_call.1} parent=1 // pred_check_branch
      %59 = sbr.rel (0) target = $region25
    $region24: #{tpu_custom_call.1} parent=1 // pred_region
      _
    $region25: #{tpu_custom_call.1} parent=1 // pred_fallthru
      _
    // Predicated region
    $region26: #{tpu_custom_call.1} parent=1 // pred_check
      _
    $region27: #{tpu_custom_call.1} parent=1 // pred_check_branch
      %61 = sbr.rel (0) target = $region29
    $region28: #{tpu_custom_call.1} parent=1 // pred_region
      _
    $region29: #{tpu_custom_call.1} parent=1 // pred_fallthru
      _
    // Predicated region
    $region30: #{tpu_custom_call.1} parent=1 // pred_check
      _
    $region31: #{tpu_custom_call.1} parent=1 // pred_check_branch
      %63 = sbr.rel (0) target = $region33
    $region32: #{tpu_custom_call.1} parent=1 // pred_region
      _
    $region33: #{tpu_custom_call.1} parent=1 // pred_fallthru
      _
    // Predicated region
    $region34: #{tpu_custom_call.1} parent=1 // pred_check
      _
    $region35: #{tpu_custom_call.1} parent=1 // pred_check_branch
      %65 = sbr.rel (0) target = $region37
    $region36: #{tpu_custom_call.1} parent=1 // pred_region
      _
    $region37: #{tpu_custom_call.1} parent=1 // pred_fallthru
      _
    // Predicated region
    $region38: #{tpu_custom_call.1} parent=1 // pred_check
      _
    $region39: #{tpu_custom_call.1} parent=1 // pred_check_branch
      %67 = sbr.rel (0) target = $region41
    $region40: #{tpu_custom_call.1} parent=1 // pred_region
      %68 = dma.done [#allocation3], 512
    $region41: #{tpu_custom_call.1} parent=1 // pred_fallthru
      _
    // Predicated region
    $region42: #{tpu_custom_call.1} parent=1 // pred_check
      _
    $region43: #{tpu_custom_call.1} parent=1 // pred_check_branch
      %70 = sbr.rel (0) target = $region45
    $region44: #{tpu_custom_call.1} parent=1 // pred_region
      %71 = dma.done [#allocation5], 1024
    $region45: #{tpu_custom_call.1} parent=1 // pred_fallthru
      _
    // Predicated region
    $region46: #{tpu_custom_call.1} parent=1 // pred_check
      _
    $region47: #{tpu_custom_call.1} parent=1 // pred_check_branch
      %73 = sbr.rel (0) target = $region49
    $region48: #{tpu_custom_call.1} parent=1 // pred_region
      %74 = dma.done [#allocation5], 2048
    $region49: #{tpu_custom_call.1} parent=1 // pred_fallthru
      _
    %v77 = vld [vmem:[#allocation2] sm:$0xff]
    %v78 = vld [vmem:[#allocation2 + $0x8] sm:$0xff]
    %v79 = vld [vmem:[#allocation2 + $0x10] sm:$0xff]
    %v80 = vld [vmem:[#allocation2 + $0x18] sm:$0xff]
    %v81 = vpack.c.bf16 %v78, %v77
    %v82 = vpack.c.bf16 %v80, %v79
    %v83 = vld [vmem:[#allocation4] sm:$0xff]
    %v84 = vld [vmem:[#allocation4 + $0x8] sm:$0xff]
    %v85 = vld [vmem:[#allocation4 + $0x10] sm:$0xff]
    %v86 = vld [vmem:[#allocation4 + $0x18] sm:$0xff]
    %v87 = vld [vmem:[#allocation4 + $0x20] sm:$0xff]
    %v88 = vld [vmem:[#allocation4 + $0x28] sm:$0xff]
    %v89 = vld [vmem:[#allocation4 + $0x30] sm:$0xff]
    %v90 = vld [vmem:[#allocation4 + $0x38] sm:$0xff]
    %v91 = vld [vmem:[%s2] sm:$0x3]
    %v93 = vlaneseq
    %v94 = vshrl.u32 %v93, 7
    %v95 = vsub.s32 0, %v94
    %v96 = vrot.slane %v91, %v95
    %v97 = vlaneseq
    %v98 = vshrl.u32 %v97, 7
    %v99 = vsub.s32 1, %v98
    %v100 = vrot.slane %v91, %v99
    %v111 = vunpack.c.l.b16 %v83
    %v112 = vunpack.c.h.b16 %v83
    %v113 = vunpack.c.l.b16 %v84
    %v114 = vunpack.c.h.b16 %v84
    %v115 = vunpack.c.l.b16 %v85
    %v116 = vunpack.c.h.b16 %v85
    %v117 = vunpack.c.l.b16 %v86
    %v118 = vunpack.c.h.b16 %v86
    %v119 = vunpack.c.l.b16 %v87
    %v120 = vunpack.c.h.b16 %v87
    %v121 = vunpack.c.l.b16 %v88
    %v122 = vunpack.c.h.b16 %v88
    %v123 = vunpack.c.l.b16 %v89
    %v124 = vunpack.c.h.b16 %v89
    %v125 = vunpack.c.l.b16 %v90
    %v126 = vunpack.c.h.b16 %v90
    %v127 = vpack.c.b16 %v113, %v111
    %v128 = vpack.c.b16 %v114, %v112
    %v129 = vpack.c.b16 %v117, %v115
    %v130 = vpack.c.b16 %v118, %v116
    %v131 = vpack.c.b16 %v121, %v119
    %v132 = vpack.c.b16 %v122, %v120
    %v133 = vpack.c.b16 %v125, %v123
    %v134 = vpack.c.b16 %v126, %v124
    %vm143 = vcmask 523264
    %v145 = vsel %vm143, %v81, 0
    %v148 = vsel %vm143, %v82, 0
    %150 = vmatprep.subr.bf16.mxu0 %v128
    %151 = vmatpush1.bf16.msra.mxu0 %v127
    %152 = vmatprep.subr.bf16.mxu0 %v130
    %153 = vmatpush1.bf16.msra.mxu0 %v129
    %154 = vmatprep.subr.bf16.mxu0 %v132
    %155 = vmatpush1.bf16.msra.mxu0 %v131
    %156 = vmatprep.subr.bf16.mxu0 %v134
    %157 = vmatpush1.bf16.msra.mxu0 %v133
    %158 = vmatprep.subr.bf16.mxu0 0
    %159 = vmatpush1.bf16.msra.mxu0 0
    %160 = vmatprep.subr.bf16.mxu0 0
    %161 = vmatpush1.bf16.msra.mxu0 0
    %162 = vmatprep.subr.bf16.mxu0 0
    %163 = vmatpush1.bf16.msra.mxu0 0
    %164 = vmatprep.subr.bf16.mxu0 0
    %165 = vmatpush1.bf16.msra.mxu0 0
    %166 = vmatprep.subr.bf16.mxu0 0
    %167 = vmatpush1.bf16.msra.mxu0 0
    %168 = vmatprep.subr.bf16.mxu0 0
    %169 = vmatpush1.bf16.msra.mxu0 0
    %170 = vmatprep.subr.bf16.mxu0 0
    %171 = vmatpush1.bf16.msra.mxu0 0
    %172 = vmatprep.subr.bf16.mxu0 0
    %173 = vmatpush1.bf16.msra.mxu0 0
    %174 = vmatprep.subr.bf16.mxu0 0
    %175 = vmatpush1.bf16.msra.mxu0 0
    %176 = vmatprep.subr.bf16.mxu0 0
    %177 = vmatpush1.bf16.msra.mxu0 0
    %178 = vmatprep.subr.bf16.mxu0 0
    %179 = vmatpush1.bf16.msra.mxu0 0
    %180 = vmatprep.subr.bf16.mxu0 0
    %181 = vmatpush1.bf16.msra.mxu0 0
    %182 = vmatprep.mubr.bf16.mxu0 0
    %183 = vmatmul.mubr.bf16.gmra.mrb[0].mxu0 %v145
    %v184 = vpop.f32.mrb[0].mxu0
    %v185 = vadd.f32 %v96, %v184
    %v186 = vpop.f32.mrb[0].mxu0
    %v187 = vadd.f32 %v100, %v186
    %v188 = vpop.f32.mrb[0].mxu0
    %v189 = vadd.f32 %v96, %v188
    %v190 = vpop.f32.mrb[0].mxu0
    %v191 = vadd.f32 %v100, %v190
    %192 = vmatprep.mubr.bf16.mxu0 0
    %193 = vmatmul.mubr.bf16.gmra.mrb[0].mxu0 %v148
    %v194 = vpop.f32.mrb[0].mxu0
    %v195 = vadd.f32 %v96, %v194
    %v196 = vpop.f32.mrb[0].mxu0
    %v197 = vadd.f32 %v100, %v196
    %v198 = vpop.f32.mrb[0].mxu0
    %v199 = vadd.f32 %v96, %v198
    %v200 = vpop.f32.mrb[0].mxu0
    %v201 = vadd.f32 %v100, %v200
    %202 = vdwg.mxu0
    %v203 = vpack.c.bf16 %v189, %v185
    %v204 = vpack.c.bf16 %v191, %v187
    %v205 = vpack.c.bf16 %v199, %v195
    %v206 = vpack.c.bf16 %v201, %v197
    %v207 = vxor.u32 %v203, 2147516416
    %v208 = vxor.u32 %v204, 2147516416
    %v209 = vxor.u32 %v205, 2147516416
    %v210 = vxor.u32 %v206, 2147516416
    %v212 = vmul.bf16 %v207, 1069105081
    %v213 = vpow.bf16.pop %v212
    %v215 = vmul.bf16 %v208, 1069105081
    %v216 = vpow.bf16.pop %v215
    %v218 = vmul.bf16 %v209, 1069105081
    %v219 = vpow.bf16.pop %v218
    %v221 = vmul.bf16 %v210, 1069105081
    %v222 = vpow.bf16.pop %v221
    %v223 = vadd.bf16 %v213, 1065369472
    %v224 = vadd.bf16 %v216, 1065369472
    %v225 = vadd.bf16 %v219, 1065369472
    %v226 = vadd.bf16 %v222, 1065369472
    %v227 = vrcp.bf16.pop %v223
    %v228 = vmul.bf16 1065369472, %v227
    %v229 = vrcp.bf16.pop %v224
    %v230 = vmul.bf16 1065369472, %v229
    %v231 = vrcp.bf16.pop %v225
    %v232 = vmul.bf16 1065369472, %v231
    %v233 = vrcp.bf16.pop %v226
    %v234 = vmul.bf16 1065369472, %v233
    %v235 = vmul.bf16 %v203, %v228
    %v236 = vmul.bf16 %v204, %v230
    %v237 = vmul.bf16 %v205, %v232
    %v238 = vmul.bf16 %v206, %v234
    %v239 = vld [vmem:[#allocation6] sm:$0xf]
    %v240 = vld [vmem:[#allocation6 + $0x4] sm:$0xf]
    %v241 = vld [vmem:[#allocation6 + $0x8] sm:$0xf]
    %v242 = vld [vmem:[#allocation6 + $0xc] sm:$0xf]
    %v243 = vld [vmem:[#allocation6 + $0x10] sm:$0xf]
    %v244 = vld [vmem:[#allocation6 + $0x14] sm:$0xf]
    %v245 = vld [vmem:[#allocation6 + $0x18] sm:$0xf]
    %v246 = vld [vmem:[#allocation6 + $0x1c] sm:$0xf]
    %v247 = vld [vmem:[#allocation6 + $0x20] sm:$0xf]
    %v248 = vld [vmem:[#allocation6 + $0x24] sm:$0xf]
    %v249 = vld [vmem:[#allocation6 + $0x28] sm:$0xf]
    %v250 = vld [vmem:[#allocation6 + $0x2c] sm:$0xf]
    %v251 = vld [vmem:[#allocation6 + $0x30] sm:$0xf]
    %v252 = vld [vmem:[#allocation6 + $0x34] sm:$0xf]
    %v253 = vld [vmem:[#allocation6 + $0x38] sm:$0xf]
    %v254 = vld [vmem:[#allocation6 + $0x3c] sm:$0xf]
    %v255 = vld [vmem:[#allocation6 + $0x40] sm:$0xf]
    %v256 = vld [vmem:[#allocation6 + $0x44] sm:$0xf]
    %v257 = vld [vmem:[#allocation6 + $0x48] sm:$0xf]
    %v258 = vld [vmem:[#allocation6 + $0x4c] sm:$0xf]
    %v259 = vld [vmem:[#allocation6 + $0x50] sm:$0xf]
    %v260 = vld [vmem:[#allocation6 + $0x54] sm:$0xf]
    %v261 = vld [vmem:[#allocation6 + $0x58] sm:$0xf]
    %v262 = vld [vmem:[#allocation6 + $0x5c] sm:$0xf]
    %v263 = vld [vmem:[#allocation6 + $0x60] sm:$0xf]
    %v264 = vld [vmem:[#allocation6 + $0x64] sm:$0xf]
    %v265 = vld [vmem:[#allocation6 + $0x68] sm:$0xf]
    %v266 = vld [vmem:[#allocation6 + $0x6c] sm:$0xf]
    %v267 = vld [vmem:[#allocation6 + $0x70] sm:$0xf]
    %v268 = vld [vmem:[#allocation6 + $0x74] sm:$0xf]
    %v269 = vld [vmem:[#allocation6 + $0x78] sm:$0xf]
    %v270 = vld [vmem:[#allocation6 + $0x7c] sm:$0xf]
    %v271 = vld [vmem:[%s4] sm:$0x1]
    %v273 = vlaneseq
    %v274 = vshrl.u32 %v273, 7
    %v275 = vsub.s32 0, %v274
    %v276 = vrot.slane %v271, %v275
    %v310 = vunpack.c.l.b16 %v239
    %v311 = vunpack.c.l.b16 %v240
    %v312 = vunpack.c.l.b16 %v241
    %v313 = vunpack.c.l.b16 %v242
    %v314 = vunpack.c.l.b16 %v243
    %v315 = vunpack.c.l.b16 %v244
    %v316 = vunpack.c.l.b16 %v245
    %v317 = vunpack.c.l.b16 %v246
    %v318 = vunpack.c.l.b16 %v247
    %v319 = vunpack.c.l.b16 %v248
    %v320 = vunpack.c.l.b16 %v249
    %v321 = vunpack.c.l.b16 %v250
    %v322 = vunpack.c.l.b16 %v251
    %v323 = vunpack.c.l.b16 %v252
    %v324 = vunpack.c.l.b16 %v253
    %v325 = vunpack.c.l.b16 %v254
    %v326 = vunpack.c.l.b16 %v255
    %v327 = vunpack.c.l.b16 %v256
    %v328 = vunpack.c.l.b16 %v257
    %v329 = vunpack.c.l.b16 %v258
    %v330 = vunpack.c.l.b16 %v259
    %v331 = vunpack.c.l.b16 %v260
    %v332 = vunpack.c.l.b16 %v261
    %v333 = vunpack.c.l.b16 %v262
    %v334 = vunpack.c.l.b16 %v263
    %v335 = vunpack.c.l.b16 %v264
    %v336 = vunpack.c.l.b16 %v265
    %v337 = vunpack.c.l.b16 %v266
    %v338 = vunpack.c.l.b16 %v267
    %v339 = vunpack.c.l.b16 %v268
    %v340 = vunpack.c.l.b16 %v269
    %v341 = vunpack.c.l.b16 %v270
    %v342 = vpack.c.b16 %v311, %v310
    %v343 = vpack.c.b16 %v313, %v312
    %v344 = vpack.c.b16 %v315, %v314
    %v345 = vpack.c.b16 %v317, %v316
    %v346 = vpack.c.b16 %v319, %v318
    %v347 = vpack.c.b16 %v321, %v320
    %v348 = vpack.c.b16 %v323, %v322
    %v349 = vpack.c.b16 %v325, %v324
    %v350 = vpack.c.b16 %v327, %v326
    %v351 = vpack.c.b16 %v329, %v328
    %v352 = vpack.c.b16 %v331, %v330
    %v353 = vpack.c.b16 %v333, %v332
    %v354 = vpack.c.b16 %v335, %v334
    %v355 = vpack.c.b16 %v337, %v336
    %v356 = vpack.c.b16 %v339, %v338
    %v357 = vpack.c.b16 %v341, %v340
    %374 = vmatprep.subr.bf16.mxu0 0
    %375 = vmatpush1.bf16.msra.mxu0 %v342
    %376 = vmatprep.subr.bf16.mxu0 0
    %377 = vmatpush1.bf16.msra.mxu0 %v343
    %378 = vmatprep.subr.bf16.mxu0 0
    %379 = vmatpush1.bf16.msra.mxu0 %v344
    %380 = vmatprep.subr.bf16.mxu0 0
    %381 = vmatpush1.bf16.msra.mxu0 %v345
    %382 = vmatprep.subr.bf16.mxu0 0
    %383 = vmatpush1.bf16.msra.mxu0 %v346
    %384 = vmatprep.subr.bf16.mxu0 0
    %385 = vmatpush1.bf16.msra.mxu0 %v347
    %386 = vmatprep.subr.bf16.mxu0 0
    %387 = vmatpush1.bf16.msra.mxu0 %v348
    %388 = vmatprep.subr.bf16.mxu0 0
    %389 = vmatpush1.bf16.msra.mxu0 %v349
    %390 = vmatprep.subr.bf16.mxu0 0
    %391 = vmatpush1.bf16.msra.mxu0 %v350
    %392 = vmatprep.subr.bf16.mxu0 0
    %393 = vmatpush1.bf16.msra.mxu0 %v351
    %394 = vmatprep.subr.bf16.mxu0 0
    %395 = vmatpush1.bf16.msra.mxu0 %v352
    %396 = vmatprep.subr.bf16.mxu0 0
    %397 = vmatpush1.bf16.msra.mxu0 %v353
    %398 = vmatprep.subr.bf16.mxu0 0
    %399 = vmatpush1.bf16.msra.mxu0 %v354
    %400 = vmatprep.subr.bf16.mxu0 0
    %401 = vmatpush1.bf16.msra.mxu0 %v355
    %402 = vmatprep.subr.bf16.mxu0 0
    %403 = vmatpush1.bf16.msra.mxu0 %v356
    %404 = vmatprep.subr.bf16.mxu0 0
    %405 = vmatpush1.bf16.msra.mxu0 %v357
    %406 = vmatprep.mubr.bf16.mxu0 %v236
    %407 = vmatmul.mubr.bf16.gmra.mrb[0].mxu0 %v235
    %v408 = vpop.f32.mrb[0].mxu0
    %v409 = vadd.f32 %v276, %v408
    %v410 = vpop.f32.mrb[0].mxu0
    %v411 = vpop.f32.mrb[0].mxu0
    %v412 = vadd.f32 %v276, %v411
    %v413 = vpop.f32.mrb[0].mxu0
    %414 = vmatprep.mubr.bf16.mxu0 %v238
    %415 = vmatmul.mubr.bf16.gmra.mrb[0].mxu0 %v237
    %v416 = vpop.f32.mrb[0].mxu0
    %v417 = vadd.f32 %v276, %v416
    %v418 = vpop.f32.mrb[0].mxu0
    %v419 = vpop.f32.mrb[0].mxu0
    %v420 = vadd.f32 %v276, %v419
    %v421 = vpop.f32.mrb[0].mxu0
    %422 = vdwg.mxu0
    %v423 = vpack.c.bf16 %v412, %v409
    %v424 = vpack.c.bf16 %v420, %v417
    %v425 = vxor.u32 %v423, 2147516416
    %v426 = vxor.u32 %v424, 2147516416
    %v428 = vmul.bf16 %v425, 1069105081
    %v429 = vpow.bf16.pop %v428
    %v431 = vmul.bf16 %v426, 1069105081
    %v432 = vpow.bf16.pop %v431
    %v433 = vadd.bf16 %v429, 1065369472
    %v434 = vadd.bf16 %v432, 1065369472
    %v435 = vrcp.bf16.pop %v433
    %v436 = vmul.bf16 1065369472, %v435
    %v437 = vrcp.bf16.pop %v434
    %v438 = vmul.bf16 1065369472, %v437
    %v439 = vmul.bf16 %v423, %v436
    %v440 = vmul.bf16 %v424, %v438
    %v441 = vld [vmem:[%s5] sm:$0xff]
    %v442 = vld [vmem:[%s5 + $0x8] sm:$0xf]
    %v443 = vld [vmem:[%s5 + $0xc] sm:$0xff]
    %v444 = vld [vmem:[%s5 + $0x14] sm:$0xf]
    %v445 = vld [vmem:[%s5 + $0x18] sm:$0xff]
    %v446 = vld [vmem:[%s5 + $0x20] sm:$0xf]
    %v447 = vld [vmem:[%s5 + $0x24] sm:$0xff]
    %v448 = vld [vmem:[%s5 + $0x2c] sm:$0xf]
    %v449 = vld [vmem:[%s5 + $0x30] sm:$0xff]
    %v450 = vld [vmem:[%s5 + $0x38] sm:$0xf]
    %v451 = vld [vmem:[%s5 + $0x3c] sm:$0xff]
    %v452 = vld [vmem:[%s5 + $0x44] sm:$0xf]
    %v453 = vld [vmem:[%s5 + $0x48] sm:$0xff]
    %v454 = vld [vmem:[%s5 + $0x50] sm:$0xf]
    %v455 = vld [vmem:[%s5 + $0x54] sm:$0xff]
    %v456 = vld [vmem:[%s5 + $0x5c] sm:$0xf]
    %v457 = vld [vmem:[%s5 + $0x60] sm:$0xff]
    %v458 = vld [vmem:[%s5 + $0x68] sm:$0xf]
    %v459 = vld [vmem:[%s5 + $0x6c] sm:$0xff]
    %v460 = vld [vmem:[%s5 + $0x74] sm:$0xf]
    %v461 = vld [vmem:[%s5 + $0x78] sm:$0xff]
    %v462 = vld [vmem:[%s5 + $0x80] sm:$0xf]
    %v463 = vld [vmem:[%s5 + $0x84] sm:$0xff]
    %v464 = vld [vmem:[%s5 + $0x8c] sm:$0xf]
    %v465 = vld [vmem:[%s5 + $0x90] sm:$0xff]
    %v466 = vld [vmem:[%s5 + $0x98] sm:$0xf]
    %v467 = vld [vmem:[%s5 + $0x9c] sm:$0xff]
    %v468 = vld [vmem:[%s5 + $0xa4] sm:$0xf]
    %v469 = vld [vmem:[%s5 + $0xa8] sm:$0xff]
    %v470 = vld [vmem:[%s5 + $0xb0] sm:$0xf]
    %v471 = vld [vmem:[%s5 + $0xb4] sm:$0xff]
    %v472 = vld [vmem:[%s5 + $0xbc] sm:$0xf]
    %v473 = vld [vmem:[%s6] sm:$0x7]
    %v475 = vlaneseq
    %v476 = vshrl.u32 %v475, 7
    %v477 = vsub.s32 0, %v476
    %v478 = vrot.slane %v473, %v477
    %v479 = vlaneseq
    %v480 = vshrl.u32 %v479, 7
    %v481 = vsub.s32 1, %v480
    %v482 = vrot.slane %v473, %v481
    %v483 = vlaneseq
    %v484 = vshrl.u32 %v483, 7
    %v485 = vsub.s32 2, %v484
    %v486 = vrot.slane %v473, %v485
    %v522 = vunpack.c.l.b16 %v441
    %v523 = vunpack.c.h.b16 %v441
    %v524 = vunpack.c.l.b16 %v442
    %v525 = vunpack.c.l.b16 %v443
    %v526 = vunpack.c.h.b16 %v443
    %v527 = vunpack.c.l.b16 %v444
    %v528 = vunpack.c.l.b16 %v445
    %v529 = vunpack.c.h.b16 %v445
    %v530 = vunpack.c.l.b16 %v446
    %v531 = vunpack.c.l.b16 %v447
    %v532 = vunpack.c.h.b16 %v447
    %v533 = vunpack.c.l.b16 %v448
    %v534 = vunpack.c.l.b16 %v449
    %v535 = vunpack.c.h.b16 %v449
    %v536 = vunpack.c.l.b16 %v450
    %v537 = vunpack.c.l.b16 %v451
    %v538 = vunpack.c.h.b16 %v451
    %v539 = vunpack.c.l.b16 %v452
    %v540 = vunpack.c.l.b16 %v453
    %v541 = vunpack.c.h.b16 %v453
    %v542 = vunpack.c.l.b16 %v454
    %v543 = vunpack.c.l.b16 %v455
    %v544 = vunpack.c.h.b16 %v455
    %v545 = vunpack.c.l.b16 %v456
    %v546 = vunpack.c.l.b16 %v457
    %v547 = vunpack.c.h.b16 %v457
    %v548 = vunpack.c.l.b16 %v458
    %v549 = vunpack.c.l.b16 %v459
    %v550 = vunpack.c.h.b16 %v459
    %v551 = vunpack.c.l.b16 %v460
    %v552 = vunpack.c.l.b16 %v461
    %v553 = vunpack.c.h.b16 %v461
    %v554 = vunpack.c.l.b16 %v462
    %v555 = vunpack.c.l.b16 %v463
    %v556 = vunpack.c.h.b16 %v463
    %v557 = vunpack.c.l.b16 %v464
    %v558 = vunpack.c.l.b16 %v465
    %v559 = vunpack.c.h.b16 %v465
    %v560 = vunpack.c.l.b16 %v466
    %v561 = vunpack.c.l.b16 %v467
    %v562 = vunpack.c.h.b16 %v467
    %v563 = vunpack.c.l.b16 %v468
    %v564 = vunpack.c.l.b16 %v469
    %v565 = vunpack.c.h.b16 %v469
    %v566 = vunpack.c.l.b16 %v470
    %v567 = vunpack.c.l.b16 %v471
    %v568 = vunpack.c.h.b16 %v471
    %v569 = vunpack.c.l.b16 %v472
    %v570 = vpack.c.b16 %v525, %v522
    %v571 = vpack.c.b16 %v526, %v523
    %v572 = vpack.c.b16 %v527, %v524
    %v573 = vpack.c.b16 %v531, %v528
    %v574 = vpack.c.b16 %v532, %v529
    %v575 = vpack.c.b16 %v533, %v530
    %v576 = vpack.c.b16 %v537, %v534
    %v577 = vpack.c.b16 %v538, %v535
    %v578 = vpack.c.b16 %v539, %v536
    %v579 = vpack.c.b16 %v543, %v540
    %v580 = vpack.c.b16 %v544, %v541
    %v581 = vpack.c.b16 %v545, %v542
    %v582 = vpack.c.b16 %v549, %v546
    %v583 = vpack.c.b16 %v550, %v547
    %v584 = vpack.c.b16 %v551, %v548
    %v585 = vpack.c.b16 %v555, %v552
    %v586 = vpack.c.b16 %v556, %v553
    %v587 = vpack.c.b16 %v557, %v554
    %v588 = vpack.c.b16 %v561, %v558
    %v589 = vpack.c.b16 %v562, %v559
    %v590 = vpack.c.b16 %v563, %v560
    %v591 = vpack.c.b16 %v567, %v564
    %v592 = vpack.c.b16 %v568, %v565
    %v593 = vpack.c.b16 %v569, %v566
    %618 = vmatprep.subr.bf16.mxu0 %v571
    %619 = vmatpush1.bf16.msra.mxu0 %v570
    %620 = vmatprep.subr.bf16.mxu0 %v574
    %621 = vmatpush1.bf16.msra.mxu0 %v573
    %622 = vmatprep.subr.bf16.mxu0 %v577
    %623 = vmatpush1.bf16.msra.mxu0 %v576
    %624 = vmatprep.subr.bf16.mxu0 %v580
    %625 = vmatpush1.bf16.msra.mxu0 %v579
    %626 = vmatprep.subr.bf16.mxu0 %v583
    %627 = vmatpush1.bf16.msra.mxu0 %v582
    %628 = vmatprep.subr.bf16.mxu0 %v586
    %629 = vmatpush1.bf16.msra.mxu0 %v585
    %630 = vmatprep.subr.bf16.mxu0 %v589
    %631 = vmatpush1.bf16.msra.mxu0 %v588
    %632 = vmatprep.subr.bf16.mxu0 %v592
    %633 = vmatpush1.bf16.msra.mxu0 %v591
    %634 = vmatprep.subr.bf16.mxu0 0
    %635 = vmatpush1.bf16.msra.mxu0 0
    %636 = vmatprep.subr.bf16.mxu0 0
    %637 = vmatpush1.bf16.msra.mxu0 0
    %638 = vmatprep.subr.bf16.mxu0 0
    %639 = vmatpush1.bf16.msra.mxu0 0
    %640 = vmatprep.subr.bf16.mxu0 0
    %641 = vmatpush1.bf16.msra.mxu0 0
    %642 = vmatprep.subr.bf16.mxu0 0
    %643 = vmatpush1.bf16.msra.mxu0 0
    %644 = vmatprep.subr.bf16.mxu0 0
    %645 = vmatpush1.bf16.msra.mxu0 0
    %646 = vmatprep.subr.bf16.mxu0 0
    %647 = vmatpush1.bf16.msra.mxu0 0
    %648 = vmatprep.subr.bf16.mxu0 0
    %649 = vmatpush1.bf16.msra.mxu0 0
    %650 = vmatprep.mubr.bf16.mxu0 0
    %651 = vmatmul.mubr.bf16.gmra.mrb[0].mxu0 %v439
    %v652 = vpop.f32.mrb[0].mxu0
    %v653 = vadd.f32 %v478, %v652
    %v654 = vpop.f32.mrb[0].mxu0
    %v655 = vadd.f32 %v482, %v654
    %v656 = vpop.f32.mrb[0].mxu0
    %v657 = vadd.f32 %v478, %v656
    %v658 = vpop.f32.mrb[0].mxu0
    %v659 = vadd.f32 %v482, %v658
    %660 = vmatprep.mubr.bf16.mxu0 0
    %661 = vmatmul.mubr.bf16.gmra.mrb[0].mxu0 %v440
    %v662 = vpop.f32.mrb[0].mxu0
    %v663 = vadd.f32 %v478, %v662
    %v664 = vpop.f32.mrb[0].mxu0
    %v665 = vadd.f32 %v482, %v664
    %v666 = vpop.f32.mrb[0].mxu0
    %v667 = vadd.f32 %v478, %v666
    %v668 = vpop.f32.mrb[0].mxu0
    %v669 = vadd.f32 %v482, %v668
    %670 = vdwg.mxu0
    %671 = vmatprep.subr.bf16.mxu0 0
    %672 = vmatpush1.bf16.msra.mxu0 %v572
    %673 = vmatprep.subr.bf16.mxu0 0
    %674 = vmatpush1.bf16.msra.mxu0 %v575
    %675 = vmatprep.subr.bf16.mxu0 0
    %676 = vmatpush1.bf16.msra.mxu0 %v578
    %677 = vmatprep.subr.bf16.mxu0 0
    %678 = vmatpush1.bf16.msra.mxu0 %v581
    %679 = vmatprep.subr.bf16.mxu0 0
    %680 = vmatpush1.bf16.msra.mxu0 %v584
    %681 = vmatprep.subr.bf16.mxu0 0
    %682 = vmatpush1.bf16.msra.mxu0 %v587
    %683 = vmatprep.subr.bf16.mxu0 0
    %684 = vmatpush1.bf16.msra.mxu0 %v590
    %685 = vmatprep.subr.bf16.mxu0 0
    %686 = vmatpush1.bf16.msra.mxu0 %v593
    %687 = vmatprep.subr.bf16.mxu0 0
    %688 = vmatpush1.bf16.msra.mxu0 0
    %689 = vmatprep.subr.bf16.mxu0 0
    %690 = vmatpush1.bf16.msra.mxu0 0
    %691 = vmatprep.subr.bf16.mxu0 0
    %692 = vmatpush1.bf16.msra.mxu0 0
    %693 = vmatprep.subr.bf16.mxu0 0
    %694 = vmatpush1.bf16.msra.mxu0 0
    %695 = vmatprep.subr.bf16.mxu0 0
    %696 = vmatpush1.bf16.msra.mxu0 0
    %697 = vmatprep.subr.bf16.mxu0 0
    %698 = vmatpush1.bf16.msra.mxu0 0
    %699 = vmatprep.subr.bf16.mxu0 0
    %700 = vmatpush1.bf16.msra.mxu0 0
    %701 = vmatprep.subr.bf16.mxu0 0
    %702 = vmatpush1.bf16.msra.mxu0 0
    %703 = vmatprep.mubr.bf16.mxu0 0
    %704 = vmatmul.mubr.bf16.gmra.mrb[0].mxu0 %v439
    %v705 = vpop.f32.mrb[0].mxu0
    %v706 = vadd.f32 %v486, %v705
    %v707 = vpop.f32.mrb[0].mxu0
    %v708 = vpop.f32.mrb[0].mxu0
    %v709 = vadd.f32 %v486, %v708
    %v710 = vpop.f32.mrb[0].mxu0
    %711 = vmatprep.mubr.bf16.mxu0 0
    %712 = vmatmul.mubr.bf16.gmra.mrb[0].mxu0 %v440
    %v713 = vpop.f32.mrb[0].mxu0
    %v714 = vadd.f32 %v486, %v713
    %v715 = vpop.f32.mrb[0].mxu0
    %v716 = vpop.f32.mrb[0].mxu0
    %v717 = vadd.f32 %v486, %v716
    %v718 = vpop.f32.mrb[0].mxu0
    %719 = vdwg.mxu0
    %v720 = vpack.c.bf16 %v657, %v653
    %v721 = vpack.c.bf16 %v659, %v655
    %v722 = vpack.c.bf16 %v709, %v706
    %v723 = vpack.c.bf16 %v667, %v663
    %v724 = vpack.c.bf16 %v669, %v665
    %v725 = vpack.c.bf16 %v717, %v714
    %v726 = vxor.u32 %v720, 2147516416
    %v727 = vxor.u32 %v721, 2147516416
    %v728 = vxor.u32 %v722, 2147516416
    %v729 = vxor.u32 %v723, 2147516416
    %v730 = vxor.u32 %v724, 2147516416
    %v731 = vxor.u32 %v725, 2147516416
    %v733 = vmul.bf16 %v726, 1069105081
    %v734 = vpow.bf16.pop %v733
    %v736 = vmul.bf16 %v727, 1069105081
    %v737 = vpow.bf16.pop %v736
    %v739 = vmul.bf16 %v728, 1069105081
    %v740 = vpow.bf16.pop %v739
    %v742 = vmul.bf16 %v729, 1069105081
    %v743 = vpow.bf16.pop %v742
    %v745 = vmul.bf16 %v730, 1069105081
    %v746 = vpow.bf16.pop %v745
    %v748 = vmul.bf16 %v731, 1069105081
    %v749 = vpow.bf16.pop %v748
    %v750 = vadd.bf16 %v734, 1065369472
    %v751 = vadd.bf16 %v737, 1065369472
    %v752 = vadd.bf16 %v740, 1065369472
    %v753 = vadd.bf16 %v743, 1065369472
    %v754 = vadd.bf16 %v746, 1065369472
    %v755 = vadd.bf16 %v749, 1065369472
    %v756 = vrcp.bf16.pop %v750
    %v757 = vmul.bf16 1065369472, %v756
    %v758 = vrcp.bf16.pop %v751
    %v759 = vmul.bf16 1065369472, %v758
    %v760 = vrcp.bf16.pop %v752
    %v761 = vmul.bf16 1065369472, %v760
    %v762 = vrcp.bf16.pop %v753
    %v763 = vmul.bf16 1065369472, %v762
    %v764 = vrcp.bf16.pop %v754
    %v765 = vmul.bf16 1065369472, %v764
    %v766 = vrcp.bf16.pop %v755
    %v767 = vmul.bf16 1065369472, %v766
    %v768 = vmul.bf16 %v720, %v757
    %v769 = vmul.bf16 %v721, %v759
    %v770 = vmul.bf16 %v722, %v761
    %v771 = vmul.bf16 %v723, %v763
    %v772 = vmul.bf16 %v724, %v765
    %v773 = vmul.bf16 %v725, %v767
    %v774 = vld [vmem:[%s7] sm:$0xf]
    %v775 = vld [vmem:[%s7 + $0x4] sm:$0xf]
    %v776 = vld [vmem:[%s7 + $0x8] sm:$0xf]
    %v777 = vld [vmem:[%s7 + $0xc] sm:$0xf]
    %v778 = vld [vmem:[%s7 + $0x10] sm:$0xf]
    %v779 = vld [vmem:[%s7 + $0x14] sm:$0xf]
    %v780 = vld [vmem:[%s7 + $0x18] sm:$0xf]
    %v781 = vld [vmem:[%s7 + $0x1c] sm:$0xf]
    %v782 = vld [vmem:[%s7 + $0x20] sm:$0xf]
    %v783 = vld [vmem:[%s7 + $0x24] sm:$0xf]
    %v784 = vld [vmem:[%s7 + $0x28] sm:$0xf]
    %v785 = vld [vmem:[%s7 + $0x2c] sm:$0xf]
    %v786 = vld [vmem:[%s7 + $0x30] sm:$0xf]
    %v787 = vld [vmem:[%s7 + $0x34] sm:$0xf]
    %v788 = vld [vmem:[%s7 + $0x38] sm:$0xf]
    %v789 = vld [vmem:[%s7 + $0x3c] sm:$0xf]
    %v790 = vld [vmem:[%s7 + $0x40] sm:$0xf]
    %v791 = vld [vmem:[%s7 + $0x44] sm:$0xf]
    %v792 = vld [vmem:[%s7 + $0x48] sm:$0xf]
    %v793 = vld [vmem:[%s7 + $0x4c] sm:$0xf]
    %v794 = vld [vmem:[%s7 + $0x50] sm:$0xf]
    %v795 = vld [vmem:[%s7 + $0x54] sm:$0xf]
    %v796 = vld [vmem:[%s7 + $0x58] sm:$0xf]
    %v797 = vld [vmem:[%s7 + $0x5c] sm:$0xf]
    %v798 = vld [vmem:[%s7 + $0x60] sm:$0xf]
    %v799 = vld [vmem:[%s7 + $0x64] sm:$0xf]
    %v800 = vld [vmem:[%s7 + $0x68] sm:$0xf]
    %v801 = vld [vmem:[%s7 + $0x6c] sm:$0xf]
    %v802 = vld [vmem:[%s7 + $0x70] sm:$0xf]
    %v803 = vld [vmem:[%s7 + $0x74] sm:$0xf]
    %v804 = vld [vmem:[%s7 + $0x78] sm:$0xf]
    %v805 = vld [vmem:[%s7 + $0x7c] sm:$0xf]
    %v806 = vld [vmem:[%s7 + $0x80] sm:$0xf]
    %v807 = vld [vmem:[%s7 + $0x84] sm:$0xf]
    %v808 = vld [vmem:[%s7 + $0x88] sm:$0xf]
    %v809 = vld [vmem:[%s7 + $0x8c] sm:$0xf]
    %v810 = vld [vmem:[%s7 + $0x90] sm:$0xf]
    %v811 = vld [vmem:[%s7 + $0x94] sm:$0xf]
    %v812 = vld [vmem:[%s7 + $0x98] sm:$0xf]
    %v813 = vld [vmem:[%s7 + $0x9c] sm:$0xf]
    %v814 = vld [vmem:[%s7 + $0xa0] sm:$0xf]
    %v815 = vld [vmem:[%s7 + $0xa4] sm:$0xf]
    %v816 = vld [vmem:[%s7 + $0xa8] sm:$0xf]
    %v817 = vld [vmem:[%s7 + $0xac] sm:$0xf]
    %v818 = vld [vmem:[%s7 + $0xb0] sm:$0xf]
    %v819 = vld [vmem:[%s7 + $0xb4] sm:$0xf]
    %v820 = vld [vmem:[%s7 + $0xb8] sm:$0xf]
    %v821 = vld [vmem:[%s7 + $0xbc] sm:$0xf]
    %v822 = vld [vmem:[%s8] sm:$0x1]
    %v824 = vlaneseq
    %v825 = vshrl.u32 %v824, 7
    %v826 = vsub.s32 0, %v825
    %v827 = vrot.slane %v822, %v826
    %v877 = vunpack.c.l.b16 %v774
    %v878 = vunpack.c.l.b16 %v775
    %v879 = vunpack.c.l.b16 %v776
    %v880 = vunpack.c.l.b16 %v777
    %v881 = vunpack.c.l.b16 %v778
    %v882 = vunpack.c.l.b16 %v779
    %v883 = vunpack.c.l.b16 %v780
    %v884 = vunpack.c.l.b16 %v781
    %v885 = vunpack.c.l.b16 %v782
    %v886 = vunpack.c.l.b16 %v783
    %v887 = vunpack.c.l.b16 %v784
    %v888 = vunpack.c.l.b16 %v785
    %v889 = vunpack.c.l.b16 %v786
    %v890 = vunpack.c.l.b16 %v787
    %v891 = vunpack.c.l.b16 %v788
    %v892 = vunpack.c.l.b16 %v789
    %v893 = vunpack.c.l.b16 %v790
    %v894 = vunpack.c.l.b16 %v791
    %v895 = vunpack.c.l.b16 %v792
    %v896 = vunpack.c.l.b16 %v793
    %v897 = vunpack.c.l.b16 %v794
    %v898 = vunpack.c.l.b16 %v795
    %v899 = vunpack.c.l.b16 %v796
    %v900 = vunpack.c.l.b16 %v797
    %v901 = vunpack.c.l.b16 %v798
    %v902 = vunpack.c.l.b16 %v799
    %v903 = vunpack.c.l.b16 %v800
    %v904 = vunpack.c.l.b16 %v801
    %v905 = vunpack.c.l.b16 %v802
    %v906 = vunpack.c.l.b16 %v803
    %v907 = vunpack.c.l.b16 %v804
    %v908 = vunpack.c.l.b16 %v805
    %v909 = vunpack.c.l.b16 %v806
    %v910 = vunpack.c.l.b16 %v807
    %v911 = vunpack.c.l.b16 %v808
    %v912 = vunpack.c.l.b16 %v809
    %v913 = vunpack.c.l.b16 %v810
    %v914 = vunpack.c.l.b16 %v811
    %v915 = vunpack.c.l.b16 %v812
    %v916 = vunpack.c.l.b16 %v813
    %v917 = vunpack.c.l.b16 %v814
    %v918 = vunpack.c.l.b16 %v815
    %v919 = vunpack.c.l.b16 %v816
    %v920 = vunpack.c.l.b16 %v817
    %v921 = vunpack.c.l.b16 %v818
    %v922 = vunpack.c.l.b16 %v819
    %v923 = vunpack.c.l.b16 %v820
    %v924 = vunpack.c.l.b16 %v821
    %v925 = vpack.c.b16 %v878, %v877
    %v926 = vpack.c.b16 %v880, %v879
    %v927 = vpack.c.b16 %v882, %v881
    %v928 = vpack.c.b16 %v884, %v883
    %v929 = vpack.c.b16 %v886, %v885
    %v930 = vpack.c.b16 %v888, %v887
    %v931 = vpack.c.b16 %v890, %v889
    %v932 = vpack.c.b16 %v892, %v891
    %v933 = vpack.c.b16 %v894, %v893
    %v934 = vpack.c.b16 %v896, %v895
    %v935 = vpack.c.b16 %v898, %v897
    %v936 = vpack.c.b16 %v900, %v899
    %v937 = vpack.c.b16 %v902, %v901
    %v938 = vpack.c.b16 %v904, %v903
    %v939 = vpack.c.b16 %v906, %v905
    %v940 = vpack.c.b16 %v908, %v907
    %v941 = vpack.c.b16 %v910, %v909
    %v942 = vpack.c.b16 %v912, %v911
    %v943 = vpack.c.b16 %v914, %v913
    %v944 = vpack.c.b16 %v916, %v915
    %v945 = vpack.c.b16 %v918, %v917
    %v946 = vpack.c.b16 %v920, %v919
    %v947 = vpack.c.b16 %v922, %v921
    %v948 = vpack.c.b16 %v924, %v923
    %973 = vmatprep.subr.bf16.mxu0 0
    %974 = vmatpush1.bf16.msra.mxu0 %v925
    %975 = vmatprep.subr.bf16.mxu0 0
    %976 = vmatpush1.bf16.msra.mxu0 %v926
    %977 = vmatprep.subr.bf16.mxu0 0
    %978 = vmatpush1.bf16.msra.mxu0 %v927
    %979 = vmatprep.subr.bf16.mxu0 0
    %980 = vmatpush1.bf16.msra.mxu0 %v928
    %981 = vmatprep.subr.bf16.mxu0 0
    %982 = vmatpush1.bf16.msra.mxu0 %v929
    %983 = vmatprep.subr.bf16.mxu0 0
    %984 = vmatpush1.bf16.msra.mxu0 %v930
    %985 = vmatprep.subr.bf16.mxu0 0
    %986 = vmatpush1.bf16.msra.mxu0 %v931
    %987 = vmatprep.subr.bf16.mxu0 0
    %988 = vmatpush1.bf16.msra.mxu0 %v932
    %989 = vmatprep.subr.bf16.mxu0 0
    %990 = vmatpush1.bf16.msra.mxu0 %v933
    %991 = vmatprep.subr.bf16.mxu0 0
    %992 = vmatpush1.bf16.msra.mxu0 %v934
    %993 = vmatprep.subr.bf16.mxu0 0
    %994 = vmatpush1.bf16.msra.mxu0 %v935
    %995 = vmatprep.subr.bf16.mxu0 0
    %996 = vmatpush1.bf16.msra.mxu0 %v936
    %997 = vmatprep.subr.bf16.mxu0 0
    %998 = vmatpush1.bf16.msra.mxu0 %v937
    %999 = vmatprep.subr.bf16.mxu0 0
    %1000 = vmatpush1.bf16.msra.mxu0 %v938
    %1001 = vmatprep.subr.bf16.mxu0 0
    %1002 = vmatpush1.bf16.msra.mxu0 %v939
    %1003 = vmatprep.subr.bf16.mxu0 0
    %1004 = vmatpush1.bf16.msra.mxu0 %v940
    %1005 = vmatprep.mubr.bf16.mxu0 %v769
    %1006 = vmatmul.mubr.bf16.gmra.mrb[0].mxu0 %v768
    %v1007 = vpop.f32.mrb[0].mxu0
    %v1008 = vadd.f32 %v827, %v1007
    %v1009 = vpop.f32.mrb[0].mxu0
    %v1010 = vpop.f32.mrb[0].mxu0
    %v1011 = vadd.f32 %v827, %v1010
    %v1012 = vpop.f32.mrb[0].mxu0
    %1013 = vmatprep.mubr.bf16.mxu0 %v772
    %1014 = vmatmul.mubr.bf16.gmra.mrb[0].mxu0 %v771
    %v1015 = vpop.f32.mrb[0].mxu0
    %v1016 = vadd.f32 %v827, %v1015
    %v1017 = vpop.f32.mrb[0].mxu0
    %v1018 = vpop.f32.mrb[0].mxu0
    %v1019 = vadd.f32 %v827, %v1018
    %v1020 = vpop.f32.mrb[0].mxu0
    %1021 = vdwg.mxu0
    %1022 = vmatprep.subr.bf16.mxu0 0
    %1023 = vmatpush1.bf16.msra.mxu0 %v941
    %1024 = vmatprep.subr.bf16.mxu0 0
    %1025 = vmatpush1.bf16.msra.mxu0 %v942
    %1026 = vmatprep.subr.bf16.mxu0 0
    %1027 = vmatpush1.bf16.msra.mxu0 %v943
    %1028 = vmatprep.subr.bf16.mxu0 0
    %1029 = vmatpush1.bf16.msra.mxu0 %v944
    %1030 = vmatprep.subr.bf16.mxu0 0
    %1031 = vmatpush1.bf16.msra.mxu0 %v945
    %1032 = vmatprep.subr.bf16.mxu0 0
    %1033 = vmatpush1.bf16.msra.mxu0 %v946
    %1034 = vmatprep.subr.bf16.mxu0 0
    %1035 = vmatpush1.bf16.msra.mxu0 %v947
    %1036 = vmatprep.subr.bf16.mxu0 0
    %1037 = vmatpush1.bf16.msra.mxu0 %v948
    %1038 = vmatprep.subr.bf16.mxu0 0
    %1039 = vmatpush1.bf16.msra.mxu0 0
    %1040 = vmatprep.subr.bf16.mxu0 0
    %1041 = vmatpush1.bf16.msra.mxu0 0
    %1042 = vmatprep.subr.bf16.mxu0 0
    %1043 = vmatpush1.bf16.msra.mxu0 0
    %1044 = vmatprep.subr.bf16.mxu0 0
    %1045 = vmatpush1.bf16.msra.mxu0 0
    %1046 = vmatprep.subr.bf16.mxu0 0
    %1047 = vmatpush1.bf16.msra.mxu0 0
    %1048 = vmatprep.subr.bf16.mxu0 0
    %1049 = vmatpush1.bf16.msra.mxu0 0
    %1050 = vmatprep.subr.bf16.mxu0 0
    %1051 = vmatpush1.bf16.msra.mxu0 0
    %1052 = vmatprep.subr.bf16.mxu0 0
    %1053 = vmatpush1.bf16.msra.mxu0 0
    %1054 = vmatprep.mubr.bf16.mxu0 0
    %1055 = vmatmul.mubr.bf16.gmra.mrb[0].mxu0 %v770
    %v1056 = vpop.f32.mrb[0].mxu0
    %v1057 = vadd.f32 %v1008, %v1056
    %v1058 = vpop.f32.mrb[0].mxu0
    %v1059 = vpop.f32.mrb[0].mxu0
    %v1060 = vadd.f32 %v1011, %v1059
    %v1061 = vpop.f32.mrb[0].mxu0
    %1062 = vmatprep.mubr.bf16.mxu0 0
    %1063 = vmatmul.mubr.bf16.gmra.mrb[0].mxu0 %v773
    %v1064 = vpop.f32.mrb[0].mxu0
    %v1065 = vadd.f32 %v1016, %v1064
    %v1066 = vpop.f32.mrb[0].mxu0
    %v1067 = vpop.f32.mrb[0].mxu0
    %v1068 = vadd.f32 %v1019, %v1067
    %v1069 = vpop.f32.mrb[0].mxu0
    %1070 = vdwg.mxu0
    %vm1071 = vcmp.gt.f32.partialorder %v1057, 20.0
    %vm1072 = vcmp.gt.f32.partialorder %v1060, 20.0
    %vm1073 = vcmp.gt.f32.partialorder %v1065, 20.0
    %vm1074 = vcmp.gt.f32.partialorder %v1068, 20.0
    %v1075 = vmin.f32 %v1057, 20.0
    %v1076 = vmin.f32 %v1060, 20.0
    %v1077 = vmin.f32 %v1065, 20.0
    %v1078 = vmin.f32 %v1068, 20.0
    %v1079 = vmul.f32 %v1075, 1.442695
    %v1080 = vpow.pop %v1079
    %v1081 = vmul.f32 %v1076, 1.442695
    %v1082 = vpow.pop %v1081
    %v1083 = vmul.f32 %v1077, 1.442695
    %v1084 = vpow.pop %v1083
    %v1085 = vmul.f32 %v1078, 1.442695
    %v1086 = vpow.pop %v1085
    %v1087 = vadd.f32 %v1080, 1.0
    %v1088 = vlog2.pop %v1087
    %v1089 = vmul.f32 %v1088, 0.6931472
    %v1090 = vmul.f32 -0.5, %v1080
    %v1091 = vadd.f32 %v1090, 1.0
    %v1092 = vmul.f32 %v1091, %v1080
    %v1093 = vand.u32 2147483647, %v1080
    %vm1094 = vcmp.lt.f32.partialorder %v1093, 0.0004427343
    %v1095 = vsel %vm1094, %v1092, %v1089
    %v1096 = vadd.f32 %v1082, 1.0
    %v1097 = vlog2.pop %v1096
    %v1098 = vmul.f32 %v1097, 0.6931472
    %v1099 = vmul.f32 -0.5, %v1082
    %v1100 = vadd.f32 %v1099, 1.0
    %v1101 = vmul.f32 %v1100, %v1082
    %v1102 = vand.u32 2147483647, %v1082
    %vm1103 = vcmp.lt.f32.partialorder %v1102, 0.0004427343
    %v1104 = vsel %vm1103, %v1101, %v1098
    %v1105 = vadd.f32 %v1084, 1.0
    %v1106 = vlog2.pop %v1105
    %v1107 = vmul.f32 %v1106, 0.6931472
    %v1108 = vmul.f32 -0.5, %v1084
    %v1109 = vadd.f32 %v1108, 1.0
    %v1110 = vmul.f32 %v1109, %v1084
    %v1111 = vand.u32 2147483647, %v1084
    %vm1112 = vcmp.lt.f32.partialorder %v1111, 0.0004427343
    %v1113 = vsel %vm1112, %v1110, %v1107
    %v1114 = vadd.f32 %v1086, 1.0
    %v1115 = vlog2.pop %v1114
    %v1116 = vmul.f32 %v1115, 0.6931472
    %v1117 = vmul.f32 -0.5, %v1086
    %v1118 = vadd.f32 %v1117, 1.0
    %v1119 = vmul.f32 %v1118, %v1086
    %v1120 = vand.u32 2147483647, %v1086
    %vm1121 = vcmp.lt.f32.partialorder %v1120, 0.0004427343
    %v1122 = vsel %vm1121, %v1119, %v1116
    %v1123 = vsel %vm1071, %v1057, %v1095
    %v1124 = vsel %vm1072, %v1060, %v1104
    %v1125 = vsel %vm1073, %v1065, %v1113
    %v1126 = vsel %vm1074, %v1068, %v1122
    %vm1127 = vcmask 31744
    %1128 = vst.msk [vmem:[%s9] sm:$0xff] %vm1127, %v1123
    %1129 = vst.msk [vmem:[%s9 + $0x8] sm:$0xff] %vm1127, %v1124
    %1130 = vst.msk [vmem:[%s9 + $0x10] sm:$0xff] %vm1127, %v1125
    %1131 = vst.msk [vmem:[%s9 + $0x18] sm:$0xff] %vm1127, %v1126
    %1136 = vrot.lane.b32.xlu0 %v1123, 124
    %v1137 = vpop.permute.xlu0 %1136
    %1138 = vrot.lane.b32.xlu0 %v1124, 124
    %v1139 = vpop.permute.xlu0 %1138
    %1140 = vrot.lane.b32.xlu0 %v1125, 124
    %v1141 = vpop.permute.xlu0 %1140
    %1142 = vrot.lane.b32.xlu0 %v1126, 124
    %v1143 = vpop.permute.xlu0 %1142
    %vm1148 = vcmask 7168
    %1149 = vst.msk [vmem:[%s10] sm:$0xff] %vm1148, %v1137
    %1150 = vst.msk [vmem:[%s10 + $0x8] sm:$0xff] %vm1148, %v1139
    %1151 = vst.msk [vmem:[%s10 + $0x10] sm:$0xff] %vm1148, %v1141
    %1152 = vst.msk [vmem:[%s10 + $0x18] sm:$0xff] %vm1148, %v1143
    // Predicated region
    $region50: #{tpu_custom_call.1} parent=1 // pred_check
      _
    $region51: #{tpu_custom_call.1} parent=1 // pred_check_branch
      %1154 = sbr.rel (0) target = $region53
    $region52: #{tpu_custom_call.1} parent=1 // pred_region
      _
    $region53: #{tpu_custom_call.1} parent=1 // pred_fallthru
      _
    // Predicated region
    $region54: #{tpu_custom_call.1} parent=1 // pred_check
      _
    $region55: #{tpu_custom_call.1} parent=1 // pred_check_branch
      %1156 = sbr.rel (0) target = $region57
    $region56: #{tpu_custom_call.1} parent=1 // pred_region
      _
    $region57: #{tpu_custom_call.1} parent=1 // pred_fallthru
      _
    // Predicated region
    $region58: #{tpu_custom_call.1} parent=1 // pred_check
      _
    $region59: #{tpu_custom_call.1} parent=1 // pred_check_branch
      %1158 = sbr.rel (0) target = $region61
    $region60: #{tpu_custom_call.1} parent=1 // pred_region
      _
    $region61: #{tpu_custom_call.1} parent=1 // pred_fallthru
      _
    // Predicated region
    $region62: #{tpu_custom_call.1} parent=1 // pred_check
      _
    $region63: #{tpu_custom_call.1} parent=1 // pred_check_branch
      %1160 = sbr.rel (0) target = $region65
    $region64: #{tpu_custom_call.1} parent=1 // pred_region
      _
    $region65: #{tpu_custom_call.1} parent=1 // pred_fallthru
      _
    %1161 = vsyncpa [#allocation3], 1
    %1162 = vsyncpa [#allocation5], 1

</llo_original>
